<compile_context>
chip_gen: v6e
topology: v6e:2x2x1
jax: 0.10.0
libtpu: 0.0.40
codegen_flags: <defaults>
</compile_context>

<pallas_src>
import functools

import jax
import jax.numpy as jnp
from jax.experimental import pallas as pl
from jax.experimental.pallas import tpu as pltpu


def _round_up(n, m):
    return ((n + m - 1) // m) * m


def _pad_axis(a, axis, target):
    pad = target - a.shape[axis]
    if pad <= 0:
        return a
    widths = [(0, 0)] * a.ndim
    widths[axis] = (0, pad)
    return jnp.pad(a, widths)


# ------------------------ fused backbone + head kernel ------------------------
def fused_kernel(x_ref, w1_ref, b1_ref, w2_ref, b2_ref, o_ref, acc_ref, *, inv_s):
    # x_ref : (C, ts)   bf16  -- spatial tile of batch b, channels-first
    # w1_ref: (C, Hp)   bf16  -- 1x1-conv weight (lane-padded hidden)
    # b1_ref: (1, Hp)   f32
    # w2_ref: (Hp, Np)  f32   -- head weight (lane-padded classes)
    # b2_ref: (1, Np)   f32
    # o_ref : (1, Np)   f32   -- logits for batch b (written at finalize only)
    # acc_ref: (1, Hp)  f32   -- pooled-sum accumulator (VMEM scratch)
    s = pl.program_id(1)

    @pl.when(s == 0)
    def _init():
        acc_ref[...] = jnp.zeros_like(acc_ref)

    # pointwise conv == contraction over the channel axis (MXU, f32 accumulate)
    feat = jax.lax.dot_general(
        x_ref[...], w1_ref[...],
        dimension_numbers=(((0,), (0,)), ((), ())),
        preferred_element_type=jnp.float32,
    )                                                      # (ts, Hp)
    feat = jnp.maximum(feat + b1_ref[...], 0.0)            # bias + ReLU (f32 VPU)
    acc_ref[...] += jnp.sum(feat, axis=0, keepdims=True)   # pool numerator

    @pl.when(s == pl.num_programs(1) - 1)
    def _finalize():
        pooled = acc_ref[...] * inv_s                      # mean = sum * (1/S)
        logits = jnp.dot(pooled, w2_ref[...],
                         preferred_element_type=jnp.float32)
        o_ref[...] = logits + b2_ref[...]


def fused_forward(x_bcs, w1, b1, w2, b2):
    """x_bcs: (B, C, S) bf16; returns padded logits of shape (B, 1, Np) f32."""
    B, C, S = x_bcs.shape
    Hp = w1.shape[1]
    Np = w2.shape[1]

    # Spatial tile: largest 128-multiple that divides S (full extent fallback).
    # Tiny at these toy shapes; for realistic shapes size against VMEM
    # (v7x has 64 MiB -> prefer a smaller tile + deeper pipelining).
    for cand in (512, 256, 128):
        if S % cand == 0:
            ts = cand
            break
    else:
        ts = S
    s_tiles = S // ts
    inv_s = 1.0 / float(S)

    kernel = functools.partial(fused_kernel, inv_s=inv_s)

    return pl.pallas_call(
        kernel,
        out_shape=jax.ShapeDtypeStruct((B, 1, Np), jnp.float32),
        grid_spec=pltpu.PrefetchScalarGridSpec(
            num_scalar_prefetch=0,
            grid=(B, s_tiles),
            in_specs=[
                pl.BlockSpec((None, C, ts), lambda b, s: (b, 0, s)),   # x
                pl.BlockSpec((C, Hp), lambda b, s: (0, 0)),            # w1
                pl.BlockSpec((1, Hp), lambda b, s: (0, 0)),            # b1
                pl.BlockSpec((Hp, Np), lambda b, s: (0, 0)),           # w2
                pl.BlockSpec((1, Np), lambda b, s: (0, 0)),            # b2
            ],
            out_specs=pl.BlockSpec((None, 1, Np), lambda b, s: (b, 0, 0)),
            scratch_shapes=[pltpu.VMEM((1, Hp), jnp.float32)],
        ),
        compiler_params=pltpu.CompilerParams(
            dimension_semantics=("parallel", "arbitrary")),
    )(x_bcs, w1, b1, w2, b2)


# -------------------------------- model wrapper --------------------------------
def classifier_model(x_nchw, params, label=None):
    """Mirrors ClassifierModel.forward: x = head(backbone(x)) when label is None."""
    B, C, H, W = x_nchw.shape
    S = H * W
    hidden = params["w1"].shape[1]
    n_cls = params["w2"].shape[1]
    Hp = _round_up(hidden, 128)
    Np = _round_up(n_cls, 128)

    # NCHW -> (B, C, S): pure reshape, NO HBM transpose; the channel
    # contraction happens inside the kernel. Activations downcast to bf16.
    x = x_nchw.reshape(B, C, S).astype(jnp.bfloat16)

    w1 = _pad_axis(params["w1"].astype(jnp.bfloat16), 1, Hp)                   # (C, Hp)
    b1 = _pad_axis(params["b1"].astype(jnp.float32), 1, Hp)                    # (1, Hp)
    w2 = _pad_axis(_pad_axis(params["w2"].astype(jnp.float32), 0, Hp), 1, Np)  # (Hp, Np)
    b2 = _pad_axis(params["b2"].astype(jnp.float32), 1, Np)                    # (1, Np)

    logits_padded = fused_forward(x, w1, b1, w2, b2)       # (B, 1, Np)
    out = logits_padded.reshape(B, Np)[:, :n_cls]

    if label is not None:
        # TODO(synk): head(x, label) variant (e.g. margin/loss head) not
        # instantiated by the generic wrapper; plain linear head used instead.
        pass
    return out


if __name__ == "__main__":
    B, C, H, W = 2, 4, 16, 16
    HIDDEN, NUM_CLASSES = 32, 8

    key = jax.random.PRNGKey(0)
    k_x, k_w1, k_b1, k_w2, k_b2 = jax.random.split(key, 5)

    x = jax.random.normal(k_x, (B, C, H, W), dtype=jnp.float32)
    params = {
        "w1": jax.random.normal(k_w1, (C, HIDDEN), dtype=jnp.float32) * 0.1,
        "b1": jax.random.normal(k_b1, (1, HIDDEN), dtype=jnp.float32) * 0.1,
        "w2": jax.random.normal(k_w2, (HIDDEN, NUM_CLASSES), dtype=jnp.float32) * 0.1,
        "b2": jax.random.normal(k_b2, (1, NUM_CLASSES), dtype=jnp.float32) * 0.1,
    }

    out = classifier_model(x, params, label=None)
    out = jax.block_until_ready(out)

    # pure-JAX reference (same bf16-quantized activations/conv weight as kernel)
    xq = x.astype(jnp.bfloat16).astype(jnp.float32)
    w1q = params["w1"].astype(jnp.bfloat16).astype(jnp.float32)
    x_flat = jnp.transpose(xq, (0, 2, 3, 1)).reshape(B, H * W, C)
    feat_ref = jnp.mean(
        jnp.maximum(x_flat @ w1q + params["b1"][None], 0.0), axis=1)
    ref = feat_ref @ params["w2"] + params["b2"]

    assert out.shape == (B, NUM_CLASSES)
    assert jnp.allclose(out, ref, atol=1e-2, rtol=1e-2), (
        f"max abs diff {jnp.max(jnp.abs(out - ref))}")

    print("KERNEL_OK")
</pallas_src>

<mosaic_0001>
module attributes {stable_mosaic.version = 11 : i64} {
  func.func @fused_kernel(%arg0: i32, %arg1: i32, %arg2: memref<1x4x256xbf16, #tpu.memory_space<vmem>>, %arg3: memref<4x128xbf16, #tpu.memory_space<vmem>>, %arg4: memref<1x128xf32, #tpu.memory_space<vmem>>, %arg5: memref<128x128xf32, #tpu.memory_space<vmem>>, %arg6: memref<1x128xf32, #tpu.memory_space<vmem>>, %arg7: memref<1x1x128xf32, #tpu.memory_space<vmem>>, %arg8: memref<1x128xf32, #tpu.memory_space<vmem>>) attributes {dimension_semantics = [#tpu.dimension_semantics<parallel>, #tpu.dimension_semantics<arbitrary>], iteration_bounds = array<i64: 2, 1>, scalar_prefetch = 0 : i64, scratch_operands = 1 : i64, tpu.core_type = #tpu.core_type<tc>, window_params = [{transform_indices = @transform_0, window_bounds = array<i64: 1, 4, 256>}, {pipeline_mode = #tpu.pipeline_mode<synchronous>, transform_indices = @transform_1, window_bounds = array<i64: 4, 128>}, {pipeline_mode = #tpu.pipeline_mode<synchronous>, transform_indices = @transform_2, window_bounds = array<i64: 1, 128>}, {pipeline_mode = #tpu.pipeline_mode<synchronous>, transform_indices = @transform_3, window_bounds = array<i64: 128, 128>}, {pipeline_mode = #tpu.pipeline_mode<synchronous>, transform_indices = @transform_4, window_bounds = array<i64: 1, 128>}, {transform_indices = @transform_5, window_bounds = array<i64: 1, 1, 128>}]} {
    %c0_i32 = arith.constant 0 : i32
    %0 = arith.cmpi eq, %arg1, %c0_i32 : i32
    %1 = arith.extui %0 : i1 to i32
    %c0_i32_0 = arith.constant 0 : i32
    %2 = arith.cmpi ne, %1, %c0_i32_0 : i32
    scf.if %2 {
      %cst_15 = arith.constant 0.000000e+00 : f32
      %20 = vector.broadcast %cst_15 : f32 to vector<1x128xf32>
      %c0_16 = arith.constant 0 : index
      %c0_17 = arith.constant 0 : index
      %21 = vector.load %arg8[%c0_16, %c0_17] : memref<1x128xf32, #tpu.memory_space<vmem>>, vector<1x128xf32>
      tpu.vector_store %arg8[%c0_16, %c0_17], %20 {strides = array<i32>} : memref<1x128xf32, #tpu.memory_space<vmem>>, vector<1x128xf32>,
    } else {
    }
    %c0 = arith.constant 0 : index
    %c0_1 = arith.constant 0 : index
    %c0_2 = arith.constant 0 : index
    %3 = vector.load %arg2[%c0, %c0_1, %c0_2] : memref<1x4x256xbf16, #tpu.memory_space<vmem>>, vector<1x4x256xbf16>
    %4 = vector.shape_cast %3 : vector<1x4x256xbf16> to vector<4x256xbf16>
    %c0_3 = arith.constant 0 : index
    %c0_4 = arith.constant 0 : index
    %5 = vector.load %arg3[%c0_3, %c0_4] : memref<4x128xbf16, #tpu.memory_space<vmem>>, vector<4x128xbf16>
    %cst = arith.constant dense<0.000000e+00> : vector<256x128xf32>
    %6 = tpu.matmul %4, %5, %cst {dimension_numbers = #tpu.dot_dimension_numbers<[0], [0], [1], [1], [0, 1, 1, 1], [], []>} : vector<4x256xbf16>, vector<4x128xbf16>, vector<256x128xf32> -> vector<256x128xf32>
    %c0_5 = arith.constant 0 : index
    %c0_6 = arith.constant 0 : index
    %7 = vector.load %arg4[%c0_5, %c0_6] : memref<1x128xf32, #tpu.memory_space<vmem>>, vector<1x128xf32>
    %8 = vector.broadcast %7 : vector<1x128xf32> to vector<256x128xf32>
    %9 = arith.addf %6, %8 : vector<256x128xf32>
    %cst_7 = arith.constant 0.000000e+00 : f32
    %10 = vector.broadcast %cst_7 : f32 to vector<256x128xf32>
    %11 = arith.maximumf %9, %10 : vector<256x128xf32>
    %c0_8 = arith.constant 0 : index
    %c0_9 = arith.constant 0 : index
    %12 = vector.load %arg8[%c0_8, %c0_9] : memref<1x128xf32, #tpu.memory_space<vmem>>, vector<1x128xf32>
    %cst_10 = arith.constant dense<0.000000e+00> : vector<128xf32>
    %13 = vector.multi_reduction <add>, %11, %cst_10 [0] : vector<256x128xf32> to vector<128xf32>
    %14 = vector.shape_cast %13 : vector<128xf32> to vector<1x128xf32>
    %15 = arith.addf %12, %14 : vector<1x128xf32>
    %c0_11 = arith.constant 0 : index
    %c0_12 = arith.constant 0 : index
    %16 = vector.load %arg8[%c0_11, %c0_12] : memref<1x128xf32, #tpu.memory_space<vmem>>, vector<1x128xf32>
    tpu.vector_store %arg8[%c0_11, %c0_12], %15 {strides = array<i32>} : memref<1x128xf32, #tpu.memory_space<vmem>>, vector<1x128xf32>,
    %c0_i32_13 = arith.constant 0 : i32
    %17 = arith.cmpi eq, %arg1, %c0_i32_13 : i32
    %18 = arith.extui %17 : i1 to i32
    %c0_i32_14 = arith.constant 0 : i32
    %19 = arith.cmpi ne, %18, %c0_i32_14 : i32
    scf.if %19 {
      %c0_15 = arith.constant 0 : index
      %c0_16 = arith.constant 0 : index
      %20 = vector.load %arg8[%c0_15, %c0_16] : memref<1x128xf32, #tpu.memory_space<vmem>>, vector<1x128xf32>
      %cst_17 = arith.constant 3.906250e-03 : f32
      %21 = vector.broadcast %cst_17 : f32 to vector<1x128xf32>
      %22 = arith.mulf %20, %21 : vector<1x128xf32>
      %c0_18 = arith.constant 0 : index
      %c0_19 = arith.constant 0 : index
      %23 = vector.load %arg5[%c0_18, %c0_19] : memref<128x128xf32, #tpu.memory_space<vmem>>, vector<128x128xf32>
      %cst_20 = arith.constant dense<0.000000e+00> : vector<1x128xf32>
      %24 = tpu.matmul %22, %23, %cst_20 {dimension_numbers = #tpu.dot_dimension_numbers<[1], [0], [0], [1], [0, 0, 1, 1], [], []>} : vector<1x128xf32>, vector<128x128xf32>, vector<1x128xf32> -> vector<1x128xf32>
      %c0_21 = arith.constant 0 : index
      %c0_22 = arith.constant 0 : index
      %25 = vector.load %arg6[%c0_21, %c0_22] : memref<1x128xf32, #tpu.memory_space<vmem>>, vector<1x128xf32>
      %26 = arith.addf %24, %25 : vector<1x128xf32>
      %c0_23 = arith.constant 0 : index
      %c0_24 = arith.constant 0 : index
      %c0_25 = arith.constant 0 : index
      %27 = vector.load %arg7[%c0_23, %c0_24, %c0_25] : memref<1x1x128xf32, #tpu.memory_space<vmem>>, vector<1x1x128xf32>
      %28 = vector.shape_cast %27 : vector<1x1x128xf32> to vector<1x128xf32>
      %29 = vector.shape_cast %26 : vector<1x128xf32> to vector<1x1x128xf32>
      tpu.vector_store %arg7[%c0_23, %c0_24, %c0_25], %29 {strides = array<i32>} : memref<1x1x128xf32, #tpu.memory_space<vmem>>, vector<1x1x128xf32>,
    } else {
    }
    return
  }
  func.func @transform_0(%arg0: i32, %arg1: i32) -> (i32, i32, i32) {
    %c0_i32 = arith.constant 0 : i32
    %c0_i32_0 = arith.constant 0 : i32
    return %arg0, %c0_i32, %arg1 : i32, i32, i32
  }
  func.func @transform_1(%arg0: i32, %arg1: i32) -> (i32, i32) {
    %c0_i32 = arith.constant 0 : i32
    %c0_i32_0 = arith.constant 0 : i32
    %c0_i32_1 = arith.constant 0 : i32
    return %c0_i32, %c0_i32_0 : i32, i32
  }
  func.func @transform_2(%arg0: i32, %arg1: i32) -> (i32, i32) {
    %c0_i32 = arith.constant 0 : i32
    %c0_i32_0 = arith.constant 0 : i32
    %c0_i32_1 = arith.constant 0 : i32
    return %c0_i32, %c0_i32_0 : i32, i32
  }
  func.func @transform_3(%arg0: i32, %arg1: i32) -> (i32, i32) {
    %c0_i32 = arith.constant 0 : i32
    %c0_i32_0 = arith.constant 0 : i32
    %c0_i32_1 = arith.constant 0 : i32
    return %c0_i32, %c0_i32_0 : i32, i32
  }
  func.func @transform_4(%arg0: i32, %arg1: i32) -> (i32, i32) {
    %c0_i32 = arith.constant 0 : i32
    %c0_i32_0 = arith.constant 0 : i32
    %c0_i32_1 = arith.constant 0 : i32
    return %c0_i32, %c0_i32_0 : i32, i32
  }
  func.func @transform_5(%arg0: i32, %arg1: i32) -> (i32, i32, i32) {
    %c0_i32 = arith.constant 0 : i32
    %c0_i32_0 = arith.constant 0 : i32
    %c0_i32_1 = arith.constant 0 : i32
    return %arg0, %c0_i32, %c0_i32_0 : i32, i32, i32
  }
}

</mosaic_0001>

<llo_original>
// kernel: tpu_custom_call.1
$region0: #{tpu_custom_call.1}
  #allocation0 [shape = 'u32[]', space=smem, size = 0x4, offset = 0x4, fixed_abs, tag = 'smem constant byte address 0x4 - core index']
  #allocation1 [shape = 'u32[144,128]{1,0:T(1,128)}', space=vmem, size = 0x12000, scoped, tag = 'internal scratch']
  #allocation2 [shape = 'f32[1,128]{1,0:T(1,128)}', space=vmem, size = 0x200, scoped, tag = 'scratch operand']
  %s0 = inlined_call_operand.hbm [shape: bf16[2,4,256], index: 0, kind: input, shape index: {}]
  %s1 = inlined_call_operand.hbm [shape: bf16[4,128], index: 1, kind: input, shape index: {}]
  %s2 = inlined_call_operand.vmem [shape: f32[1,128], index: 2, kind: input, shape index: {}]
  %s3 = inlined_call_operand.hbm [shape: f32[128,128], index: 3, kind: input, shape index: {}]
  %s4 = inlined_call_operand.vmem [shape: f32[1,128], index: 4, kind: input, shape index: {}]
  %s5 = inlined_call_operand.hbm [shape: f32[2,1,128], index: 5, kind: output, shape index: {}]
  %s6 = sld [smem:[#allocation0]]
  $region73: #{tpu_custom_call.1} parent=0
    _
  %s8 = ssub.s32 1, %s6
  %s9 = scalar_select 0, %s8, %s6
  $region1: #{tpu_custom_call.1} parent=0
    #allocation3 [shape = 'u8[4096]{0}', space=vmem, size = 0x1000, scoped, tag = 'input window, operand 0']
    #allocation4 [shape = 's32[2]{0}', space=sflag, size = 0x8, scoped, tag = 'scoped memory for tpu_custom_call.1']
    #allocation5 [shape = 's32[2]{0}', space=sflag, size = 0x8, scoped, tag = 'scoped memory for tpu_custom_call.1']
    #allocation6 [shape = 'u8[1024]{0}', space=vmem, size = 0x400, scoped, tag = 'input window, operand 1, single buffered']
    #allocation7 [shape = 's32[1]{0}', space=sflag, size = 0x4, scoped, tag = 'scoped memory for tpu_custom_call.1']
    #allocation8 [shape = 'u8[65536]{0}', space=vmem, size = 0x10000, scoped, tag = 'input window, operand 3, single buffered']
    #allocation9 [shape = 'u8[1024]{0}', space=vmem, size = 0x400, scoped, tag = 'output window, operand 0']
    %10 = vsyncpa [#allocation4], 0
    %s11 = scalar_lea.sflag [#allocation4], 1
    %12 = vsyncpa %s11, 0
    %13 = vsyncpa [#allocation7], 0
    %14 = vsyncpa [#allocation5], 0
    %s15 = scalar_lea.sflag [#allocation5], 1
    %16 = vsyncpa %s15, 0
    loop: start=0, step=1, limit=4
    $region2: #{tpu_custom_call.1} parent=1 // loop_pre_header
      _
    $region3: #{tpu_custom_call.1} parent=1 // loop_header
      %s18 = sphi 0, %s22
      %p19 = scmp.ge.s32.totalorder %s18, 4
      %s25 = sphi 0, %s37
      %s26 = sphi 0, %s33
      %s27 = sphi 0, %s25
      %s28 = sphi 0, %s26
      %s29 = sphi 0, %s27
      %s30 = sphi 0, %s28
      %s42 = sphi 0, %s44
      %s45 = sphi 0, %s42
      %s46 = sphi 0, %s45
      %s62 = sphi 0, %s46
      %s66 = sphi 0, %s66
      %s68 = sphi 0, %s66
      %s69 = sphi 0, %s68
      %s83 = sphi 0, %s69
      %s87 = sphi 0, %s87
      %s89 = sphi 0, %s87
      %s90 = sphi 0, %s89
      %s104 = sphi 0, %s90
      %s108 = sphi 0, %s108
      %s110 = sphi 0, %s108
      %s111 = sphi 0, %s110
      %s125 = sphi 0, %s111
      %s129 = sphi 0, %s129
      %s131 = sphi 0, %s129
      %s132 = sphi 0, %s131
      %s146 = sphi 0, %s132
      %s152 = sphi 0, %s154
      %s155 = sphi 0, %s152
      %s156 = sphi 0, %s155
      %s172 = sphi 0, %s156
    $region4: #{tpu_custom_call.1} parent=1 // loop_header_branch
      %21 = sbr.rel (%p19) target = $region8
    $region5: #{tpu_custom_call.1} parent=1 // loop_body
      %s23 = ssub.s32 %s18, 1
      %s24 = ssub.s32 %s18, 2
      %s31 = sadd.s32 1, %s26
      %p32 = scmp.ge.s32.totalorder %s31, 1
      %s33 = scalar_select %p32, 0, %s31
      %s34 = sadd.s32 1, %s25
      %s35 = scalar_select %p32, %s34, %s25
      %p36 = scmp.ge.s32.totalorder %s35, 2
      %s37 = scalar_select %p36, 0, %s35
      %s38 = ssub.s32 %s25, %s37
      %s39 = ssub.s32 %s26, %s33
      %s40 = sor.u32 %s38, %s39
      %p41 = scmp.eq.s32.totalorder %s40, 0
      %s43 = sadd.s32 %s42, 1
      %s44 = scalar_select %p41, %s42, %s43
      %p47 = pneg %p41
      %p48 = scmp.eq.s32.totalorder %s18, 1
      %p49 = por %p47, %p48
      %p50 = scmp.ne.s32.totalorder %s42, %s45
      %p51 = scmp.eq.s32.totalorder %s18, 0
      %p52 = por %p50, %p51
      %p53 = scmp.ne.s32.totalorder %s42, %s45
      %p54 = scmp.eq.s32.totalorder %s23, 1
      %p55 = por %p53, %p54
      %p56 = scmp.ne.s32.totalorder %s45, %s46
      %p57 = scmp.eq.s32.totalorder %s23, 0
      %p58 = por %p56, %p57
      %p59 = scmp.ne.s32.totalorder %s45, %s46
      %p60 = scmp.eq.s32.totalorder %s24, 1
      %p61 = por %p59, %p60
      %p63 = scmp.ne.s32.totalorder %s46, %s62
      %p64 = scmp.eq.s32.totalorder %s24, 0
      %p65 = por %p63, %p64
      %s67 = sadd.s32 %s66, 1
      %p70 = scmp.eq.s32.totalorder %s18, 1
      %p71 = scmp.ne.s32.totalorder %s66, %s68
      %p72 = scmp.eq.s32.totalorder %s18, 0
      %p73 = por %p71, %p72
      %p74 = scmp.ne.s32.totalorder %s66, %s68
      %p75 = scmp.eq.s32.totalorder %s23, 1
      %p76 = por %p74, %p75
      %p77 = scmp.ne.s32.totalorder %s68, %s69
      %p78 = scmp.eq.s32.totalorder %s23, 0
      %p79 = por %p77, %p78
      %p80 = scmp.ne.s32.totalorder %s68, %s69
      %p81 = scmp.eq.s32.totalorder %s24, 1
      %p82 = por %p80, %p81
      %p84 = scmp.ne.s32.totalorder %s69, %s83
      %p85 = scmp.eq.s32.totalorder %s24, 0
      %p86 = por %p84, %p85
      %s88 = sadd.s32 %s87, 1
      %p91 = scmp.eq.s32.totalorder %s18, 1
      %p92 = scmp.ne.s32.totalorder %s87, %s89
      %p93 = scmp.eq.s32.totalorder %s18, 0
      %p94 = por %p92, %p93
      %p95 = scmp.ne.s32.totalorder %s87, %s89
      %p96 = scmp.eq.s32.totalorder %s23, 1
      %p97 = por %p95, %p96
      %p98 = scmp.ne.s32.totalorder %s89, %s90
      %p99 = scmp.eq.s32.totalorder %s23, 0
      %p100 = por %p98, %p99
      %p101 = scmp.ne.s32.totalorder %s89, %s90
      %p102 = scmp.eq.s32.totalorder %s24, 1
      %p103 = por %p101, %p102
      %p105 = scmp.ne.s32.totalorder %s90, %s104
      %p106 = scmp.eq.s32.totalorder %s24, 0
      %p107 = por %p105, %p106
      %s109 = sadd.s32 %s108, 1
      %p112 = scmp.eq.s32.totalorder %s18, 1
      %p113 = scmp.ne.s32.totalorder %s108, %s110
      %p114 = scmp.eq.s32.totalorder %s18, 0
      %p115 = por %p113, %p114
      %p116 = scmp.ne.s32.totalorder %s108, %s110
      %p117 = scmp.eq.s32.totalorder %s23, 1
      %p118 = por %p116, %p117
      %p119 = scmp.ne.s32.totalorder %s110, %s111
      %p120 = scmp.eq.s32.totalorder %s23, 0
      %p121 = por %p119, %p120
      %p122 = scmp.ne.s32.totalorder %s110, %s111
      %p123 = scmp.eq.s32.totalorder %s24, 1
      %p124 = por %p122, %p123
      %p126 = scmp.ne.s32.totalorder %s111, %s125
      %p127 = scmp.eq.s32.totalorder %s24, 0
      %p128 = por %p126, %p127
      %s130 = sadd.s32 %s129, 1
      %p133 = scmp.eq.s32.totalorder %s18, 1
      %p134 = scmp.ne.s32.totalorder %s129, %s131
      %p135 = scmp.eq.s32.totalorder %s18, 0
      %p136 = por %p134, %p135
      %p137 = scmp.ne.s32.totalorder %s129, %s131
      %p138 = scmp.eq.s32.totalorder %s23, 1
      %p139 = por %p137, %p138
      %p140 = scmp.ne.s32.totalorder %s131, %s132
      %p141 = scmp.eq.s32.totalorder %s23, 0
      %p142 = por %p140, %p141
      %p143 = scmp.ne.s32.totalorder %s131, %s132
      %p144 = scmp.eq.s32.totalorder %s24, 1
      %p145 = por %p143, %p144
      %p147 = scmp.ne.s32.totalorder %s132, %s146
      %p148 = scmp.eq.s32.totalorder %s24, 0
      %p149 = por %p147, %p148
      %s150 = ssub.s32 %s25, %s37
      %p151 = scmp.eq.s32.totalorder %s150, 0
      %s153 = sadd.s32 %s152, 1
      %s154 = scalar_select %p151, %s152, %s153
      %p157 = pneg %p151
      %p158 = scmp.eq.s32.totalorder %s18, 1
      %p159 = por %p157, %p158
      %p160 = scmp.ne.s32.totalorder %s152, %s155
      %p161 = scmp.eq.s32.totalorder %s18, 0
      %p162 = por %p160, %p161
      %p163 = scmp.ne.s32.totalorder %s152, %s155
      %p164 = scmp.eq.s32.totalorder %s23, 1
      %p165 = por %p163, %p164
      %p166 = scmp.ne.s32.totalorder %s155, %s156
      %p167 = scmp.eq.s32.totalorder %s23, 0
      %p168 = por %p166, %p167
      %p169 = scmp.ne.s32.totalorder %s155, %s156
      %p170 = scmp.eq.s32.totalorder %s24, 1
      %p171 = por %p169, %p170
      %p173 = scmp.ne.s32.totalorder %s156, %s172
      %p174 = scmp.eq.s32.totalorder %s24, 0
      %p175 = por %p173, %p174
      %p176 = scmp.le.s32.totalorder 1, %s18
      %p177 = scmp.lt.s32.totalorder %s18, 3
      %p178 = pnand %p176, %p177
      %p179 = pneg %p178
      // Predicated region
      $region9: #{tpu_custom_call.1} parent=5 // pred_check
        _
      $region10: #{tpu_custom_call.1} parent=5 // pred_check_branch
        %181 = sbr.rel (%p178) target = $region12
      $region11: #{tpu_custom_call.1} parent=5 // pred_region
        %s182 = ssub.s32 %s18, 1
        // Predicated region
        $region13: #{tpu_custom_call.1} parent=11 // pred_check
          %p183 = pneg %p79
        $region14: #{tpu_custom_call.1} parent=11 // pred_check_branch
          %185 = sbr.rel (%p183) target = $region16
        $region15: #{tpu_custom_call.1} parent=11 // pred_region
          %s187 = ssub.s32 32, 32
          %188 = vsyncadd [#allocation7], %s187
          %s190 = sshll.u32 [#allocation6], 4
          %s191 = int_to_ptr.vmem [resolvable:$true] %s190
          %193 = dma.hbm_to_vmem [thread:$0]  %s1, 32, %s191, [#allocation7]
        $region16: #{tpu_custom_call.1} parent=11 // pred_fallthru
          _
        // Predicated region
        $region17: #{tpu_custom_call.1} parent=11 // pred_check
          %p194 = pneg %p100
        $region18: #{tpu_custom_call.1} parent=11 // pred_check_branch
          %196 = sbr.rel (%p194) target = $region20
        $region19: #{tpu_custom_call.1} parent=11 // pred_region
          _
        $region20: #{tpu_custom_call.1} parent=11 // pred_fallthru
          _
        // Predicated region
        $region21: #{tpu_custom_call.1} parent=11 // pred_check
          %p197 = pneg %p121
        $region22: #{tpu_custom_call.1} parent=11 // pred_check_branch
          %199 = sbr.rel (%p197) target = $region24
        $region23: #{tpu_custom_call.1} parent=11 // pred_region
          %s201 = ssub.s32 2048, 2048
          %202 = vsyncadd [#allocation7], %s201
          %s203 = sshll.u32 [#allocation8], 4
          %s204 = int_to_ptr.vmem [resolvable:$true] %s203
          %209 = dma.hbm_to_vmem [thread:$0]  %s3, 2048, %s204, [#allocation7], 128, 128, 8
        $region24: #{tpu_custom_call.1} parent=11 // pred_fallthru
          _
        // Predicated region
        $region25: #{tpu_custom_call.1} parent=11 // pred_check
          %p210 = pneg %p142
        $region26: #{tpu_custom_call.1} parent=11 // pred_check_branch
          %212 = sbr.rel (%p210) target = $region28
        $region27: #{tpu_custom_call.1} parent=11 // pred_region
          _
        $region28: #{tpu_custom_call.1} parent=11 // pred_fallthru
          _
      $region12: #{tpu_custom_call.1} parent=5 // pred_fallthru
        _
      %p213 = scmp.lt.s32.totalorder %s18, 2
      // Predicated region
      $region29: #{tpu_custom_call.1} parent=5 // pred_check
        %p214 = pneg %p213
      $region30: #{tpu_custom_call.1} parent=5 // pred_check_branch
        %216 = sbr.rel (%p214) target = $region32
      $region31: #{tpu_custom_call.1} parent=5 // pred_region
        // Predicated region
        $region33: #{tpu_custom_call.1} parent=31 // pred_check
          %p217 = pneg %p52
        $region34: #{tpu_custom_call.1} parent=31 // pred_check_branch
          %219 = sbr.rel (%p217) target = $region36
        $region35: #{tpu_custom_call.1} parent=31 // pred_region
          %s220 = sand.u32 %s42, 1
          %s221 = scalar_lea.sflag [#allocation4], %s220
          %s222 = sand.u32 %s42, 1
          %s223 = smul.addr %s222, 4
          %s224 = scalar_lea.vmem [#allocation3], %s223
          %s225 = smul.u32 2, %s26
          %s227 = ssub.s32 64, 64
          %228 = vsyncadd %s221, %s227
          %s229 = smul.addr %s25, 2
          %s230 = sadd.s32 %s225, %s229
          %s231 = smul.addr %s230, 32
          %s232 = scalar_lea.hbm %s0, %s231
          %s234 = sshll.u32 %s224, 4
          %s235 = int_to_ptr.vmem [resolvable:$true] %s234
          %237 = dma.hbm_to_vmem [thread:$0]  %s232, 64, %s235, %s221
        $region36: #{tpu_custom_call.1} parent=31 // pred_fallthru
          _
      $region32: #{tpu_custom_call.1} parent=5 // pred_fallthru
        _
      %p238 = scmp.le.s32.totalorder 1, %s18
      %p239 = scmp.lt.s32.totalorder %s18, 3
      %p240 = pnand %p238, %p239
      %p241 = pneg %p240
      // Predicated region
      $region37: #{tpu_custom_call.1} parent=5 // pred_check
        _
      $region38: #{tpu_custom_call.1} parent=5 // pred_check_branch
        %243 = sbr.rel (%p240) target = $region40
      $region39: #{tpu_custom_call.1} parent=5 // pred_region
        %s244 = ssub.s32 %s18, 1
        %s245 = sand.u32 %s45, 1
        %s246 = scalar_lea.sflag [#allocation4], %s245
        %s247 = sand.u32 %s45, 1
        %s248 = smul.addr %s247, 4
        %s249 = scalar_lea.vmem [#allocation3], %s248
        // Predicated region
        $region41: #{tpu_custom_call.1} parent=39 // pred_check
          %p250 = pneg %p58
        $region42: #{tpu_custom_call.1} parent=39 // pred_check_branch
          %252 = sbr.rel (%p250) target = $region44
        $region43: #{tpu_custom_call.1} parent=39 // pred_region
          %253 = dma.done %s246, 64
        $region44: #{tpu_custom_call.1} parent=39 // pred_fallthru
          _
        // Predicated region
        $region45: #{tpu_custom_call.1} parent=39 // pred_check
          %p254 = pneg %p79
        $region46: #{tpu_custom_call.1} parent=39 // pred_check_branch
          %256 = sbr.rel (%p254) target = $region48
        $region47: #{tpu_custom_call.1} parent=39 // pred_region
          %257 = dma.done [#allocation7], 32
        $region48: #{tpu_custom_call.1} parent=39 // pred_fallthru
          _
        // Predicated region
        $region49: #{tpu_custom_call.1} parent=39 // pred_check
          %p258 = pneg %p121
        $region50: #{tpu_custom_call.1} parent=39 // pred_check_branch
          %260 = sbr.rel (%p258) target = $region52
        $region51: #{tpu_custom_call.1} parent=39 // pred_region
          %261 = dma.done [#allocation7], 2048
        $region52: #{tpu_custom_call.1} parent=39 // pred_fallthru
          _
        %s262 = sand.u32 %s45, 1
        %s263 = scalar_lea.sflag [#allocation4], %s262
        %s264 = sand.u32 %s45, 1
        %s265 = smul.addr %s264, 4
        %s266 = scalar_lea.vmem [#allocation3], %s265
        %p267 = pneg %p58
        %p268 = pneg %p55
        %p269 = pneg %p79
        %p270 = pneg %p76
        %p271 = pneg %p100
        %p272 = pneg %p97
        %p273 = pneg %p121
        %p274 = pneg %p118
        %p275 = pneg %p142
        %p276 = pneg %p139
        %p277 = pneg %p168
        %p278 = pneg %p165
        %s279 = sand.u32 %s155, 1
        %s280 = scalar_lea.sflag [#allocation5], %s279
        %s281 = sand.u32 %s155, 1
        %s282 = scalar_lea.vmem [#allocation9], %s281
        %s283 = smul.u32 2, %s28
        %p285 = scmp.eq.s32.totalorder %s28, 0
        // Predicated region
        $region53: #{tpu_custom_call.1} parent=39 // pred_check
          %p286 = pneg %p285
        $region54: #{tpu_custom_call.1} parent=39 // pred_check_branch
          %288 = sbr.rel (%p286) target = $region56
        $region55: #{tpu_custom_call.1} parent=39 // pred_region
          %289 = vst [vmem:[#allocation2] sm:$0x1] 0.0
        $region56: #{tpu_custom_call.1} parent=39 // pred_fallthru
          _
        %v290 = vld [vmem:[%s249] sm:$0xf]
        %v291 = vld [vmem:[#allocation6] sm:$0x3]
        %v292 = vld [vmem:[%s2] sm:$0x1]
        %v294 = vlaneseq
        %v295 = vshrl.u32 %v294, 7
        %v296 = vsub.s32 0, %v295
        %v297 = vrot.slane %v292, %v296
        %v301 = vunpack.c.l.s4 1983009808
        %v302 = vunpack.c.0.s8 %v301
        %v303 = vlaneseq
        %v304 = vshrl.u32 %v303, 7
        %v305 = vsub.s32 %v302, %v304
        %v306 = vrot.slane %v290, %v305
        %v307 = vcombine.high %v306, %v306
        %310 = vxpose.xlu0.c.b16.start [1/8] %v306, 128
        %311 = vxpose.xlu0.c.b16.cont [2/8] 0, 128
        %312 = vxpose.xlu0.c.b16.cont [3/8] 0, 128
        %313 = vxpose.xlu0.c.b16.cont [4/8] 0, 128
        %314 = vxpose.xlu0.c.b16.cont [5/8] 0, 128
        %315 = vxpose.xlu0.c.b16.cont [6/8] 0, 128
        %316 = vxpose.xlu0.c.b16.cont [7/8] 0, 128
        %317 = vxpose.xlu0.c.b16.end [8/8] 0, 128
        %v318 = vpop.trf.xlu0
        %v319 = vpop.trf.xlu0
        %v320 = vpop.trf.xlu0
        %v321 = vpop.trf.xlu0
        %v322 = vpop.trf.xlu0
        %v323 = vpop.trf.xlu0
        %v324 = vpop.trf.xlu0
        %v325 = vpop.trf.xlu0
        %326 = vxpose.xlu0.c.b16.start [1/8] %v307, 128
        %327 = vxpose.xlu0.c.b16.cont [2/8] 0, 128
        %328 = vxpose.xlu0.c.b16.cont [3/8] 0, 128
        %329 = vxpose.xlu0.c.b16.cont [4/8] 0, 128
        %330 = vxpose.xlu0.c.b16.cont [5/8] 0, 128
        %331 = vxpose.xlu0.c.b16.cont [6/8] 0, 128
        %332 = vxpose.xlu0.c.b16.cont [7/8] 0, 128
        %333 = vxpose.xlu0.c.b16.end [8/8] 0, 128
        %v334 = vpop.trf.xlu0
        %v335 = vpop.trf.xlu0
        %v336 = vpop.trf.xlu0
        %v337 = vpop.trf.xlu0
        %v338 = vpop.trf.xlu0
        %v339 = vpop.trf.xlu0
        %v340 = vpop.trf.xlu0
        %v341 = vpop.trf.xlu0
        %vm342 = vcmask 31744
        %v344 = vsel %vm342, %v318, 0
        %v347 = vsel %vm342, %v319, 0
        %v350 = vsel %vm342, %v320, 0
        %v353 = vsel %vm342, %v321, 0
        %v356 = vsel %vm342, %v322, 0
        %v359 = vsel %vm342, %v323, 0
        %v362 = vsel %vm342, %v324, 0
        %v365 = vsel %vm342, %v325, 0
        %v368 = vsel %vm342, %v334, 0
        %v371 = vsel %vm342, %v335, 0
        %v374 = vsel %vm342, %v336, 0
        %v377 = vsel %vm342, %v337, 0
        %v380 = vsel %vm342, %v338, 0
        %v383 = vsel %vm342, %v339, 0
        %v386 = vsel %vm342, %v340, 0
        %v389 = vsel %vm342, %v341, 0
        %vm391 = vcmask 1041408
        %v393 = vsel %vm391, %v291, 0
        %395 = vmatprep.subr.bf16.mxu0 0
        %396 = vmatpush1.bf16.msra.mxu0 0
        %397 = vmatprep.subr.bf16.mxu0 0
        %398 = vmatpush1.bf16.msra.mxu0 0
        %399 = vmatprep.subr.bf16.mxu0 0
        %400 = vmatpush1.bf16.msra.mxu0 0
        %401 = vmatprep.subr.bf16.mxu0 0
        %402 = vmatpush1.bf16.msra.mxu0 0
        %403 = vmatprep.subr.bf16.mxu0 0
        %404 = vmatpush1.bf16.msra.mxu0 0
        %405 = vmatprep.subr.bf16.mxu0 0
        %406 = vmatpush1.bf16.msra.mxu0 0
        %407 = vmatprep.subr.bf16.mxu0 0
        %408 = vmatpush1.bf16.msra.mxu0 0
        %409 = vmatprep.subr.bf16.mxu0 0
        %410 = vmatpush1.bf16.msra.mxu0 %v393
        %411 = vmatprep.subr.bf16.mxu0 0
        %412 = vmatpush2.bf16.msra.mxu0 0
        %413 = vmatprep.subr.bf16.mxu0 0
        %414 = vmatpush2.bf16.msra.mxu0 0
        %415 = vmatprep.subr.bf16.mxu0 0
        %416 = vmatpush2.bf16.msra.mxu0 0
        %417 = vmatprep.subr.bf16.mxu0 0
        %418 = vmatpush2.bf16.msra.mxu0 0
        %419 = vmatprep.subr.bf16.mxu0 0
        %420 = vmatpush2.bf16.msra.mxu0 0
        %421 = vmatprep.subr.bf16.mxu0 0
        %422 = vmatpush2.bf16.msra.mxu0 0
        %423 = vmatprep.subr.bf16.mxu0 0
        %424 = vmatpush2.bf16.msra.mxu0 0
        %425 = vmatprep.subr.bf16.mxu0 0
        %426 = vmatpush2.bf16.msra.mxu0 0
        %427 = vmatprep.mubr.bf16.mxu0 0
        %428 = vmatmul.mubr.bf16.gmra.mxu0 %v344
        %v429 = vpop.f32.mrf.mxu0
        %v430 = vadd.f32 %v297, %v429
        %v431 = vpop.f32.mrf.mxu0
        %v432 = vpop.f32.mrf.mxu0
        %v433 = vadd.f32 %v297, %v432
        %v434 = vpop.f32.mrf.mxu0
        %435 = vmatprep.mubr.bf16.mxu0 0
        %436 = vmatmul.mubr.bf16.gmra.mxu0 %v347
        %v437 = vpop.f32.mrf.mxu0
        %v438 = vadd.f32 %v297, %v437
        %v439 = vpop.f32.mrf.mxu0
        %v440 = vpop.f32.mrf.mxu0
        %v441 = vadd.f32 %v297, %v440
        %v442 = vpop.f32.mrf.mxu0
        %443 = vmatprep.mubr.bf16.mxu0 0
        %444 = vmatmul.mubr.bf16.gmra.mxu0 %v350
        %v445 = vpop.f32.mrf.mxu0
        %v446 = vadd.f32 %v297, %v445
        %v447 = vpop.f32.mrf.mxu0
        %v448 = vpop.f32.mrf.mxu0
        %v449 = vadd.f32 %v297, %v448
        %v450 = vpop.f32.mrf.mxu0
        %451 = vmatprep.mubr.bf16.mxu0 0
        %452 = vmatmul.mubr.bf16.gmra.mxu0 %v353
        %v453 = vpop.f32.mrf.mxu0
        %v454 = vadd.f32 %v297, %v453
        %v455 = vpop.f32.mrf.mxu0
        %v456 = vpop.f32.mrf.mxu0
        %v457 = vadd.f32 %v297, %v456
        %v458 = vpop.f32.mrf.mxu0
        %459 = vmatprep.mubr.bf16.mxu0 0
        %460 = vmatmul.mubr.bf16.gmra.mxu0 %v356
        %v461 = vpop.f32.mrf.mxu0
        %v462 = vadd.f32 %v297, %v461
        %v463 = vpop.f32.mrf.mxu0
        %v464 = vpop.f32.mrf.mxu0
        %v465 = vadd.f32 %v297, %v464
        %v466 = vpop.f32.mrf.mxu0
        %467 = vmatprep.mubr.bf16.mxu0 0
        %468 = vmatmul.mubr.bf16.gmra.mxu0 %v359
        %v469 = vpop.f32.mrf.mxu0
        %v470 = vadd.f32 %v297, %v469
        %v471 = vpop.f32.mrf.mxu0
        %v472 = vpop.f32.mrf.mxu0
        %v473 = vadd.f32 %v297, %v472
        %v474 = vpop.f32.mrf.mxu0
        %475 = vmatprep.mubr.bf16.mxu0 0
        %476 = vmatmul.mubr.bf16.gmra.mxu0 %v362
        %v477 = vpop.f32.mrf.mxu0
        %v478 = vadd.f32 %v297, %v477
        %v479 = vpop.f32.mrf.mxu0
        %v480 = vpop.f32.mrf.mxu0
        %v481 = vadd.f32 %v297, %v480
        %v482 = vpop.f32.mrf.mxu0
        %483 = vmatprep.mubr.bf16.mxu0 0
        %484 = vmatmul.mubr.bf16.gmra.mxu0 %v365
        %v485 = vpop.f32.mrf.mxu0
        %v486 = vadd.f32 %v297, %v485
        %v487 = vpop.f32.mrf.mxu0
        %v488 = vpop.f32.mrf.mxu0
        %v489 = vadd.f32 %v297, %v488
        %v490 = vpop.f32.mrf.mxu0
        %491 = vmatprep.mubr.bf16.mxu0 0
        %492 = vmatmul.mubr.bf16.gmra.mxu0 %v368
        %v493 = vpop.f32.mrf.mxu0
        %v494 = vadd.f32 %v297, %v493
        %v495 = vpop.f32.mrf.mxu0
        %v496 = vpop.f32.mrf.mxu0
        %v497 = vadd.f32 %v297, %v496
        %v498 = vpop.f32.mrf.mxu0
        %499 = vmatprep.mubr.bf16.mxu0 0
        %500 = vmatmul.mubr.bf16.gmra.mxu0 %v371
        %v501 = vpop.f32.mrf.mxu0
        %v502 = vadd.f32 %v297, %v501
        %v503 = vpop.f32.mrf.mxu0
        %v504 = vpop.f32.mrf.mxu0
        %v505 = vadd.f32 %v297, %v504
        %v506 = vpop.f32.mrf.mxu0
        %507 = vmatprep.mubr.bf16.mxu0 0
        %508 = vmatmul.mubr.bf16.gmra.mxu0 %v374
        %v509 = vpop.f32.mrf.mxu0
        %v510 = vadd.f32 %v297, %v509
        %v511 = vpop.f32.mrf.mxu0
        %v512 = vpop.f32.mrf.mxu0
        %v513 = vadd.f32 %v297, %v512
        %v514 = vpop.f32.mrf.mxu0
        %515 = vmatprep.mubr.bf16.mxu0 0
        %516 = vmatmul.mubr.bf16.gmra.mxu0 %v377
        %v517 = vpop.f32.mrf.mxu0
        %v518 = vadd.f32 %v297, %v517
        %v519 = vpop.f32.mrf.mxu0
        %v520 = vpop.f32.mrf.mxu0
        %v521 = vadd.f32 %v297, %v520
        %v522 = vpop.f32.mrf.mxu0
        %523 = vmatprep.mubr.bf16.mxu0 0
        %524 = vmatmul.mubr.bf16.gmra.mxu0 %v380
        %v525 = vpop.f32.mrf.mxu0
        %v526 = vadd.f32 %v297, %v525
        %v527 = vpop.f32.mrf.mxu0
        %v528 = vpop.f32.mrf.mxu0
        %v529 = vadd.f32 %v297, %v528
        %v530 = vpop.f32.mrf.mxu0
        %531 = vmatprep.mubr.bf16.mxu0 0
        %532 = vmatmul.mubr.bf16.gmra.mxu0 %v383
        %v533 = vpop.f32.mrf.mxu0
        %v534 = vadd.f32 %v297, %v533
        %v535 = vpop.f32.mrf.mxu0
        %v536 = vpop.f32.mrf.mxu0
        %v537 = vadd.f32 %v297, %v536
        %v538 = vpop.f32.mrf.mxu0
        %539 = vmatprep.mubr.bf16.mxu0 0
        %540 = vmatmul.mubr.bf16.gmra.mxu0 %v386
        %v541 = vpop.f32.mrf.mxu0
        %v542 = vadd.f32 %v297, %v541
        %v543 = vpop.f32.mrf.mxu0
        %v544 = vpop.f32.mrf.mxu0
        %v545 = vadd.f32 %v297, %v544
        %v546 = vpop.f32.mrf.mxu0
        %547 = vmatprep.mubr.bf16.mxu0 0
        %548 = vmatmul.mubr.bf16.gmra.mxu0 %v389
        %v549 = vpop.f32.mrf.mxu0
        %v550 = vadd.f32 %v297, %v549
        %v551 = vpop.f32.mrf.mxu0
        %v552 = vpop.f32.mrf.mxu0
        %v553 = vadd.f32 %v297, %v552
        %v554 = vpop.f32.mrf.mxu0
        %555 = vdwg.mxu0
        %v556 = vmax.f32 %v430, 0.0
        %v557 = vmax.f32 %v433, 0.0
        %v558 = vmax.f32 %v438, 0.0
        %v559 = vmax.f32 %v441, 0.0
        %v560 = vmax.f32 %v446, 0.0
        %v561 = vmax.f32 %v449, 0.0
        %v562 = vmax.f32 %v454, 0.0
        %v563 = vmax.f32 %v457, 0.0
        %v564 = vmax.f32 %v462, 0.0
        %v565 = vmax.f32 %v465, 0.0
        %v566 = vmax.f32 %v470, 0.0
        %v567 = vmax.f32 %v473, 0.0
        %v568 = vmax.f32 %v478, 0.0
        %v569 = vmax.f32 %v481, 0.0
        %v570 = vmax.f32 %v486, 0.0
        %v571 = vmax.f32 %v489, 0.0
        %v572 = vmax.f32 %v494, 0.0
        %v573 = vmax.f32 %v497, 0.0
        %v574 = vmax.f32 %v502, 0.0
        %v575 = vmax.f32 %v505, 0.0
        %v576 = vmax.f32 %v510, 0.0
        %v577 = vmax.f32 %v513, 0.0
        %v578 = vmax.f32 %v518, 0.0
        %v579 = vmax.f32 %v521, 0.0
        %v580 = vmax.f32 %v526, 0.0
        %v581 = vmax.f32 %v529, 0.0
        %v582 = vmax.f32 %v534, 0.0
        %v583 = vmax.f32 %v537, 0.0
        %v584 = vmax.f32 %v542, 0.0
        %v585 = vmax.f32 %v545, 0.0
        %v586 = vmax.f32 %v550, 0.0
        %v587 = vmax.f32 %v553, 0.0
        %v588 = vld [vmem:[#allocation2] sm:$0x1]
        %v589 = vadd.f32 %v556, %v557
        %v590 = vadd.f32 %v589, %v558
        %v591 = vadd.f32 %v590, %v559
        %v592 = vadd.f32 %v591, %v560
        %v593 = vadd.f32 %v592, %v561
        %v594 = vadd.f32 %v593, %v562
        %v595 = vadd.f32 %v594, %v563
        %v596 = vadd.f32 %v595, %v564
        %v597 = vadd.f32 %v596, %v565
        %v598 = vadd.f32 %v597, %v566
        %v599 = vadd.f32 %v598, %v567
        %v600 = vadd.f32 %v599, %v568
        %v601 = vadd.f32 %v600, %v569
        %v602 = vadd.f32 %v601, %v570
        %v603 = vadd.f32 %v602, %v571
        %v604 = vadd.f32 %v603, %v572
        %v605 = vadd.f32 %v604, %v573
        %v606 = vadd.f32 %v605, %v574
        %v607 = vadd.f32 %v606, %v575
        %v608 = vadd.f32 %v607, %v576
        %v609 = vadd.f32 %v608, %v577
        %v610 = vadd.f32 %v609, %v578
        %v611 = vadd.f32 %v610, %v579
        %v612 = vadd.f32 %v611, %v580
        %v613 = vadd.f32 %v612, %v581
        %v614 = vadd.f32 %v613, %v582
        %v615 = vadd.f32 %v614, %v583
        %v616 = vadd.f32 %v615, %v584
        %v617 = vadd.f32 %v616, %v585
        %v618 = vadd.f32 %v617, %v586
        %v619 = vadd.f32 %v618, %v587
        %v620 = vrot.slane %v619, 4
        %v621 = vadd.f32 %v619, %v620
        %v622 = vrot.slane %v621, 2
        %v623 = vadd.f32 %v621, %v622
        %v624 = vrot.slane %v623, 1
        %v625 = vadd.f32 %v623, %v624
        %v626 = vadd.f32 %v588, %v625
        %627 = vst [vmem:[#allocation2] sm:$0x1] %v626
        // Predicated region
        $region57: #{tpu_custom_call.1} parent=39 // pred_check
          %p628 = pneg %p285
        $region58: #{tpu_custom_call.1} parent=39 // pred_check_branch
          %630 = sbr.rel (%p628) target = $region60
        $region59: #{tpu_custom_call.1} parent=39 // pred_region
          %v631 = vld [vmem:[#allocation2] sm:$0x1]
          %v632 = vmul.f32 %v631, 0.00390625
          %v633 = vld [vmem:[#allocation8] sm:$0xff]
          %v634 = vld [vmem:[#allocation8 + $0x8] sm:$0xff]
          %v635 = vld [vmem:[#allocation8 + $0x10] sm:$0xff]
          %v636 = vld [vmem:[#allocation8 + $0x18] sm:$0xff]
          %v637 = vld [vmem:[#allocation8 + $0x20] sm:$0xff]
          %v638 = vld [vmem:[#allocation8 + $0x28] sm:$0xff]
          %v639 = vld [vmem:[#allocation8 + $0x30] sm:$0xff]
          %v640 = vld [vmem:[#allocation8 + $0x38] sm:$0xff]
          %v641 = vld [vmem:[#allocation8 + $0x40] sm:$0xff]
          %v642 = vld [vmem:[#allocation8 + $0x48] sm:$0xff]
          %v643 = vld [vmem:[#allocation8 + $0x50] sm:$0xff]
          %v644 = vld [vmem:[#allocation8 + $0x58] sm:$0xff]
          %v645 = vld [vmem:[#allocation8 + $0x60] sm:$0xff]
          %v646 = vld [vmem:[#allocation8 + $0x68] sm:$0xff]
          %v647 = vld [vmem:[#allocation8 + $0x70] sm:$0xff]
          %v648 = vld [vmem:[#allocation8 + $0x78] sm:$0xff]
          %v649 = vld [vmem:[%s4] sm:$0x1]
          %650 = vmatprep.subr.mxu0 0.0
          %651 = vmatpush1.msra.mxu0 %v648
          %652 = vmatprep.subr.mxu0 0.0
          %653 = vmatpush1.msra.mxu0 %v647
          %654 = vmatprep.subr.mxu0 0.0
          %655 = vmatpush1.msra.mxu0 %v646
          %656 = vmatprep.subr.mxu0 0.0
          %657 = vmatpush1.msra.mxu0 %v645
          %658 = vmatprep.subr.mxu0 0.0
          %659 = vmatpush1.msra.mxu0 %v644
          %660 = vmatprep.subr.mxu0 0.0
          %661 = vmatpush1.msra.mxu0 %v643
          %662 = vmatprep.subr.mxu0 0.0
          %663 = vmatpush1.msra.mxu0 %v642
          %664 = vmatprep.subr.mxu0 0.0
          %665 = vmatpush1.msra.mxu0 %v641
          %666 = vmatprep.subr.mxu0 0.0
          %667 = vmatpush1.msra.mxu0 %v640
          %668 = vmatprep.subr.mxu0 0.0
          %669 = vmatpush1.msra.mxu0 %v639
          %670 = vmatprep.subr.mxu0 0.0
          %671 = vmatpush1.msra.mxu0 %v638
          %672 = vmatprep.subr.mxu0 0.0
          %673 = vmatpush1.msra.mxu0 %v637
          %674 = vmatprep.subr.mxu0 0.0
          %675 = vmatpush1.msra.mxu0 %v636
          %676 = vmatprep.subr.mxu0 0.0
          %677 = vmatpush1.msra.mxu0 %v635
          %678 = vmatprep.subr.mxu0 0.0
          %679 = vmatpush1.msra.mxu0 %v634
          %680 = vmatprep.subr.mxu0 0.0
          %681 = vmatpush1.msra.mxu0 %v633
          %682 = vmatprep.subr.mxu0 0.0
          %683 = vmatpush2.msra.mxu0 0.0
          %684 = vmatprep.subr.mxu0 0.0
          %685 = vmatpush2.msra.mxu0 0.0
          %686 = vmatprep.subr.mxu0 0.0
          %687 = vmatpush2.msra.mxu0 0.0
          %688 = vmatprep.subr.mxu0 0.0
          %689 = vmatpush2.msra.mxu0 0.0
          %690 = vmatprep.subr.mxu0 0.0
          %691 = vmatpush2.msra.mxu0 0.0
          %692 = vmatprep.subr.mxu0 0.0
          %693 = vmatpush2.msra.mxu0 0.0
          %694 = vmatprep.subr.mxu0 0.0
          %695 = vmatpush2.msra.mxu0 0.0
          %696 = vmatprep.subr.mxu0 0.0
          %697 = vmatpush2.msra.mxu0 0.0
          %698 = vmatprep.subr.mxu0 0.0
          %699 = vmatpush2.msra.mxu0 0.0
          %700 = vmatprep.subr.mxu0 0.0
          %701 = vmatpush2.msra.mxu0 0.0
          %702 = vmatprep.subr.mxu0 0.0
          %703 = vmatpush2.msra.mxu0 0.0
          %704 = vmatprep.subr.mxu0 0.0
          %705 = vmatpush2.msra.mxu0 0.0
          %706 = vmatprep.subr.mxu0 0.0
          %707 = vmatpush2.msra.mxu0 0.0
          %708 = vmatprep.subr.mxu0 0.0
          %709 = vmatpush2.msra.mxu0 0.0
          %710 = vmatprep.subr.mxu0 0.0
          %711 = vmatpush2.msra.mxu0 0.0
          %712 = vmatprep.subr.mxu0 0.0
          %713 = vmatpush2.msra.mxu0 0.0
          %714 = vmatprep.mubr.f32.mxu0 0.0
          %715 = vmatmul.mubr.f32.gmra.mxu0 %v632
          %v716 = vpop.f32.mrf.mxu0
          %v717 = vadd.f32 %v649, %v716
          %v718 = vpop.f32.mrf.mxu0
          %719 = vdwg.mxu0
          %720 = vst [vmem:[%s282] sm:$0x1] %v717
        $region60: #{tpu_custom_call.1} parent=39 // pred_fallthru
          _
        %s721 = sand.u32 %s155, 1
        %s722 = scalar_lea.sflag [#allocation5], %s721
        %s723 = sand.u32 %s155, 1
        %s724 = scalar_lea.vmem [#allocation9], %s723
        // Predicated region
        $region61: #{tpu_custom_call.1} parent=39 // pred_check
          %p725 = pneg %p165
        $region62: #{tpu_custom_call.1} parent=39 // pred_check_branch
          %727 = sbr.rel (%p725) target = $region64
        $region63: #{tpu_custom_call.1} parent=39 // pred_region
          %s729 = ssub.s32 16, 16
          %730 = vsyncadd %s722, %s729
          %s731 = smul.addr %s27, 16
          %s732 = scalar_lea.hbm %s5, %s731
          %s734 = sshll.u32 %s724, 4
          %s735 = int_to_ptr.vmem [resolvable:$true] %s734
          %737 = dma.vmem_to_hbm [thread:$0]  %s735, 16, %s732, %s722
        $region64: #{tpu_custom_call.1} parent=39 // pred_fallthru
          _
      $region40: #{tpu_custom_call.1} parent=5 // pred_fallthru
        _
      %p738 = scmp.le.s32.totalorder 2, %s18
      // Predicated region
      $region65: #{tpu_custom_call.1} parent=5 // pred_check
        %p739 = pneg %p738
      $region66: #{tpu_custom_call.1} parent=5 // pred_check_branch
        %741 = sbr.rel (%p739) target = $region68
      $region67: #{tpu_custom_call.1} parent=5 // pred_region
        %s742 = ssub.s32 %s18, 2
        // Predicated region
        $region69: #{tpu_custom_call.1} parent=67 // pred_check
          %p743 = pneg %p171
        $region70: #{tpu_custom_call.1} parent=67 // pred_check_branch
          %745 = sbr.rel (%p743) target = $region72
        $region71: #{tpu_custom_call.1} parent=67 // pred_region
          %s746 = sand.u32 %s156, 1
          %s747 = scalar_lea.sflag [#allocation5], %s746
          %s748 = sand.u32 %s156, 1
          %s749 = scalar_lea.vmem [#allocation9], %s748
          %750 = dma.done %s747, 16
        $region72: #{tpu_custom_call.1} parent=67 // pred_fallthru
          _
      $region68: #{tpu_custom_call.1} parent=5 // pred_fallthru
        _
    $region6: #{tpu_custom_call.1} parent=1 // loop_footer
      %s22 = sadd.s32 1, %s18
    $region7: #{tpu_custom_call.1} parent=1 // loop_footer_branch
      %17 = sbr.rel target = $region3
    $region8: #{tpu_custom_call.1} parent=1 // loop_exit
      _
    %751 = vsyncpa [#allocation4], 1
    %s752 = scalar_lea.sflag [#allocation4], 1
    %753 = vsyncpa %s752, 1
    %754 = vsyncpa [#allocation7], 1
    %755 = vsyncpa [#allocation5], 1
    %s756 = scalar_lea.sflag [#allocation5], 1
    %757 = vsyncpa %s756, 1

</llo_original>
